<compile_context>
chip_gen: v7x
topology: tpu7x:2x2x1
jax: 0.10.0
libtpu: 0.0.40
codegen_flags: <defaults>
</compile_context>

<pallas_src>
import functools

import jax
import jax.numpy as jnp
from jax import lax
from jax.experimental import pallas as pl
from jax.experimental.pallas import tpu as pltpu

LANE = 128
ROW_ALIGN = 8    # rows padded to a multiple of 8 so (rows, 128) f32 blocks are legal
NCORES = 2       # v7x: 2 TensorCores/chip; on v5e/v6e the axis just serialises


def _bcl_kernel(dist_ref, lab_ref, out_ref, *, margin, n_valid, tile_rows,
                tiles_per_core):
    c = pl.program_id(0)      # core split ("parallel")
    i = pl.program_id(1)      # row-tile index within this core ("arbitrary")

    @pl.when(i == 0)
    def _():
        out_ref[...] = jnp.zeros_like(out_ref)

    # Global linear element index of every lane in this tile.  Masks (a) the
    # zero / undefined padding past the true element count and (b) the second
    # core's clamped surplus tiles.  int32 math is fine for < 2^31 elements.
    base = (c * tiles_per_core + i) * (tile_rows * LANE)
    rid = lax.broadcasted_iota(jnp.int32, (tile_rows, LANE), 0)
    lid = lax.broadcasted_iota(jnp.int32, (tile_rows, LANE), 1)
    valid = (base + rid * LANE + lid) < n_valid

    dist = dist_ref[...]                                 # f32 (tile_rows, 128)
    lab = lab_ref[...].astype(jnp.float32)               # uint8 -> f32, 0..255

    # PyTorch in-place remap: 1 -> -1 (change), 0 -> 1 (no-change), rest kept.
    lbl = jnp.where(lab == 1.0, -1.0, jnp.where(lab == 0.0, 1.0, lab))
    # Ignore-label (255) positions get distance zeroed.  NOTE: exactly like the
    # original module, they still contribute (1-255)/2 * margin^2 to loss_2.
    d = dist * (lbl != 255.0).astype(jnp.float32)

    pos_t = jnp.where(valid & (lbl == 1.0), 1.0, 0.0)
    neg_t = jnp.where(valid & (lbl == -1.0), 1.0, 0.0)
    t1 = jnp.where(valid, (1.0 + lbl) * 0.5 * (d * d), 0.0)
    cl = jnp.maximum(margin - d, 0.0)
    t2 = jnp.where(valid, (1.0 - lbl) * 0.5 * (cl * cl), 0.0)

    # Sublane-only fold to (1, 128); the cross-lane reduction to scalars is
    # done once in the wrapper on the tiny output.
    def fold(x):
        return jnp.sum(x, axis=0, keepdims=True)

    out_ref[0, 0] += fold(pos_t)
    out_ref[0, 1] += fold(neg_t)
    out_ref[0, 2] += fold(t1)
    out_ref[0, 3] += fold(t2)


def bcl_loss(distance, label, margin=2.0, tile_rows=1024):
    """Pallas implementation of BCL.forward(distance, label)."""
    d = distance.reshape(-1).astype(jnp.float32)
    # Module contract: label holds integral values (here {0, 1, 255}); stream
    # it as uint8 for 4x less HBM traffic than f32.
    l = label.reshape(-1).astype(jnp.uint8)
    n = d.shape[0]

    rows = pl.cdiv(n, LANE)
    rows = ((rows + ROW_ALIGN - 1) // ROW_ALIGN) * ROW_ALIGN
    total = rows * LANE
    if total != n:
        # Pad only when n is not already a multiple of 8*128; the padded
        # elements are masked out inside the kernel.
        d = jnp.pad(d, (0, total - n))
        l = jnp.pad(l, (0, total - n))
    d = d.reshape(rows, LANE)
    l = l.reshape(rows, LANE)

    tile = min(tile_rows, rows)               # rows and 1024 are multiples of 8
    total_tiles = pl.cdiv(rows, tile)
    tiles_per_core = pl.cdiv(total_tiles, NCORES)
    last_tile = total_tiles - 1

    def in_map(c, i):
        # Clamp so the second core's surplus iterations re-read a real block;
        # their contribution is fully masked in-kernel (idx >= n).
        return (jnp.minimum(c * tiles_per_core + i, last_tile), 0)

    kernel = functools.partial(
        _bcl_kernel, margin=float(margin), n_valid=n,
        tile_rows=tile, tiles_per_core=tiles_per_core)

    parts = pl.pallas_call(
        kernel,
        out_shape=jax.ShapeDtypeStruct((NCORES, 4, 1, LANE), jnp.float32),
        grid_spec=pltpu.PrefetchScalarGridSpec(
            num_scalar_prefetch=0,
            grid=(NCORES, tiles_per_core),
            in_specs=[pl.BlockSpec((tile, LANE), in_map),
                      pl.BlockSpec((tile, LANE), in_map)],
            out_specs=pl.BlockSpec((1, 4, 1, LANE), lambda c, i: (c, 0, 0, 0)),
        ),
        compiler_params=pltpu.CompilerParams(
            dimension_semantics=("parallel", "arbitrary")),
    )(d, l)

    tot = jnp.sum(parts, axis=(0, 2, 3))      # [pos_count, neg_count, s1, s2]
    return tot[2] / (tot[0] + 0.0001) + tot[3] / (tot[1] + 0.0001)


def bcl_ref(distance, label, margin=2.0):
    """Pure-JAX reference mirroring the PyTorch forward exactly."""
    distance = distance.astype(jnp.float32)
    label = label.astype(jnp.float32)
    lbl = jnp.where(label == 1.0, -1.0, jnp.where(label == 0.0, 1.0, label))
    mask = (lbl != 255.0).astype(jnp.float32)
    d = distance * mask
    pos = jnp.sum((lbl == 1.0).astype(jnp.float32)) + 0.0001
    neg = jnp.sum((lbl == -1.0).astype(jnp.float32)) + 0.0001
    l1 = jnp.sum((1.0 + lbl) / 2.0 * d * d) / pos
    l2 = jnp.sum((1.0 - lbl) / 2.0 * jnp.maximum(margin - d, 0.0) ** 2) / neg
    return l1 + l2


if __name__ == "__main__":
    key = jax.random.PRNGKey(0)
    k1, k2, k3 = jax.random.split(key, 3)

    # distance map (e.g. pairwise feature distance), label map in {0, 1, 255}
    shape = (2, 1, 16, 16)
    distance = jax.random.uniform(k1, shape, jnp.float32, 0.0, 3.0)
    label = jax.random.bernoulli(k2, 0.4, shape).astype(jnp.float32)
    # sprinkle a few ignore-label (255) pixels to exercise the mask path
    ignore = jax.random.bernoulli(k3, 0.05, shape)
    label = jnp.where(ignore, 255.0, label)

    loss = jax.block_until_ready(bcl_loss(distance, label, margin=2.0))
    ref = jax.block_until_ready(bcl_ref(distance, label, margin=2.0))

    assert jnp.allclose(loss, ref, rtol=1e-5, atol=1e-5), (loss, ref)
    print("KERNEL_OK")
</pallas_src>

<mosaic_0001>
module attributes {stable_mosaic.version = 11 : i64} {
  func.func @_bcl_kernel(%arg0: i32, %arg1: i32, %arg2: memref<8x128xf32, #tpu.memory_space<vmem>>, %arg3: memref<8x128xi8, #tpu.memory_space<vmem>>, %arg4: memref<1x4x1x128xf32, #tpu.memory_space<vmem>>) attributes {dimension_semantics = [#tpu.dimension_semantics<parallel>, #tpu.dimension_semantics<arbitrary>], iteration_bounds = array<i64: 2, 1>, scalar_prefetch = 0 : i64, scratch_operands = 0 : i64, tpu.core_type = #tpu.core_type<tc>, window_params = [{transform_indices = @transform_0, window_bounds = array<i64: 8, 128>}, {transform_indices = @transform_1, window_bounds = array<i64: 8, 128>}, {transform_indices = @transform_2, window_bounds = array<i64: 1, 4, 1, 128>}]} {
    %c0_i32 = arith.constant 0 : i32
    %0 = arith.cmpi eq, %arg1, %c0_i32 : i32
    %1 = arith.extui %0 : i1 to i32
    %c0_i32_0 = arith.constant 0 : i32
    %2 = arith.cmpi ne, %1, %c0_i32_0 : i32
    scf.if %2 {
      %cst_55 = arith.constant 0.000000e+00 : f32
      %95 = vector.broadcast %cst_55 : f32 to vector<1x4x1x128xf32>
      %c0_56 = arith.constant 0 : index
      %c0_57 = arith.constant 0 : index
      %c0_58 = arith.constant 0 : index
      %c0_59 = arith.constant 0 : index
      %96 = vector.load %arg4[%c0_56, %c0_57, %c0_58, %c0_59] : memref<1x4x1x128xf32, #tpu.memory_space<vmem>>, vector<1x4x1x128xf32>
      tpu.vector_store %arg4[%c0_56, %c0_57, %c0_58, %c0_59], %95 {strides = array<i32>} : memref<1x4x1x128xf32, #tpu.memory_space<vmem>>, vector<1x4x1x128xf32>,
    } else {
    }
    %c1_i32 = arith.constant 1 : i32
    %3 = arith.muli %arg0, %c1_i32 : i32
    %4 = arith.addi %3, %arg1 : i32
    %c1024_i32 = arith.constant 1024 : i32
    %5 = arith.muli %4, %c1024_i32 : i32
    %6 = tpu.iota {dimensions = array<i32: 0>} : vector<8x128xi32>
    %7 = tpu.iota {dimensions = array<i32: 1>} : vector<8x128xi32>
    %c128_i32 = arith.constant 128 : i32
    %8 = vector.broadcast %c128_i32 : i32 to vector<8x128xi32>
    %9 = arith.muli %6, %8 : vector<8x128xi32>
    %10 = vector.broadcast %5 : i32 to vector<8x128xi32>
    %11 = arith.addi %10, %9 : vector<8x128xi32>
    %12 = arith.addi %11, %7 : vector<8x128xi32>
    %c512_i32 = arith.constant 512 : i32
    %13 = vector.broadcast %c512_i32 : i32 to vector<8x128xi32>
    %14 = arith.cmpi slt, %12, %13 : vector<8x128xi32>
    %c0 = arith.constant 0 : index
    %c0_1 = arith.constant 0 : index
    %15 = vector.load %arg2[%c0, %c0_1] : memref<8x128xf32, #tpu.memory_space<vmem>>, vector<8x128xf32>
    %c0_2 = arith.constant 0 : index
    %c0_3 = arith.constant 0 : index
    %16 = vector.load %arg3[%c0_2, %c0_3] : memref<8x128xi8, #tpu.memory_space<vmem>>, vector<8x128xi8>
    %17 = arith.uitofp %16 : vector<8x128xi8> to vector<8x128xf32>
    %cst = arith.constant 1.000000e+00 : f32
    %18 = vector.broadcast %cst : f32 to vector<8x128xf32>
    %19 = arith.cmpf oeq, %17, %18 : vector<8x128xf32>
    %cst_4 = arith.constant 0.000000e+00 : f32
    %20 = vector.broadcast %cst_4 : f32 to vector<8x128xf32>
    %21 = arith.cmpf oeq, %17, %20 : vector<8x128xf32>
    %cst_5 = arith.constant 1.000000e+00 : f32
    %22 = vector.broadcast %cst_5 : f32 to vector<8x128xf32>
    %23 = arith.select %21, %22, %17 : vector<8x128xi1>, vector<8x128xf32>
    %cst_6 = arith.constant -1.000000e+00 : f32
    %24 = vector.broadcast %cst_6 : f32 to vector<8x128xf32>
    %25 = arith.select %19, %24, %23 : vector<8x128xi1>, vector<8x128xf32>
    %cst_7 = arith.constant 2.550000e+02 : f32
    %26 = vector.broadcast %cst_7 : f32 to vector<8x128xf32>
    %27 = arith.cmpf one, %25, %26 : vector<8x128xf32>
    %28 = arith.extui %27 : vector<8x128xi1> to vector<8x128xi32>
    %29 = arith.sitofp %28 : vector<8x128xi32> to vector<8x128xf32>
    %30 = arith.mulf %15, %29 : vector<8x128xf32>
    %cst_8 = arith.constant 1.000000e+00 : f32
    %31 = vector.broadcast %cst_8 : f32 to vector<8x128xf32>
    %32 = arith.cmpf oeq, %25, %31 : vector<8x128xf32>
    %33 = arith.andi %14, %32 : vector<8x128xi1>
    %cst_9 = arith.constant 1.000000e+00 : f32
    %cst_10 = arith.constant 0.000000e+00 : f32
    %34 = vector.broadcast %cst_9 : f32 to vector<8x128xf32>
    %35 = vector.broadcast %cst_10 : f32 to vector<8x128xf32>
    %36 = arith.select %33, %34, %35 : vector<8x128xi1>, vector<8x128xf32>
    %cst_11 = arith.constant -1.000000e+00 : f32
    %37 = vector.broadcast %cst_11 : f32 to vector<8x128xf32>
    %38 = arith.cmpf oeq, %25, %37 : vector<8x128xf32>
    %39 = arith.andi %14, %38 : vector<8x128xi1>
    %cst_12 = arith.constant 1.000000e+00 : f32
    %cst_13 = arith.constant 0.000000e+00 : f32
    %40 = vector.broadcast %cst_12 : f32 to vector<8x128xf32>
    %41 = vector.broadcast %cst_13 : f32 to vector<8x128xf32>
    %42 = arith.select %39, %40, %41 : vector<8x128xi1>, vector<8x128xf32>
    %cst_14 = arith.constant 1.000000e+00 : f32
    %43 = vector.broadcast %cst_14 : f32 to vector<8x128xf32>
    %44 = arith.addf %43, %25 : vector<8x128xf32>
    %cst_15 = arith.constant 5.000000e-01 : f32
    %45 = vector.broadcast %cst_15 : f32 to vector<8x128xf32>
    %46 = arith.mulf %44, %45 : vector<8x128xf32>
    %47 = arith.mulf %30, %30 : vector<8x128xf32>
    %48 = arith.mulf %46, %47 : vector<8x128xf32>
    %cst_16 = arith.constant 0.000000e+00 : f32
    %49 = vector.broadcast %cst_16 : f32 to vector<8x128xf32>
    %50 = arith.select %14, %48, %49 : vector<8x128xi1>, vector<8x128xf32>
    %cst_17 = arith.constant 2.000000e+00 : f32
    %51 = vector.broadcast %cst_17 : f32 to vector<8x128xf32>
    %52 = arith.subf %51, %30 : vector<8x128xf32>
    %cst_18 = arith.constant 0.000000e+00 : f32
    %53 = vector.broadcast %cst_18 : f32 to vector<8x128xf32>
    %54 = arith.maximumf %52, %53 : vector<8x128xf32>
    %cst_19 = arith.constant 1.000000e+00 : f32
    %55 = vector.broadcast %cst_19 : f32 to vector<8x128xf32>
    %56 = arith.subf %55, %25 : vector<8x128xf32>
    %cst_20 = arith.constant 5.000000e-01 : f32
    %57 = vector.broadcast %cst_20 : f32 to vector<8x128xf32>
    %58 = arith.mulf %56, %57 : vector<8x128xf32>
    %59 = arith.mulf %54, %54 : vector<8x128xf32>
    %60 = arith.mulf %58, %59 : vector<8x128xf32>
    %cst_21 = arith.constant 0.000000e+00 : f32
    %61 = vector.broadcast %cst_21 : f32 to vector<8x128xf32>
    %62 = arith.select %14, %60, %61 : vector<8x128xi1>, vector<8x128xf32>
    %c0_22 = arith.constant 0 : index
    %c0_23 = arith.constant 0 : index
    %c0_24 = arith.constant 0 : index
    %c0_25 = arith.constant 0 : index
    %63 = vector.load %arg4[%c0_22, %c0_23, %c0_24, %c0_25] : memref<1x4x1x128xf32, #tpu.memory_space<vmem>>, vector<1x1x1x128xf32>
    %64 = vector.shape_cast %63 : vector<1x1x1x128xf32> to vector<1x128xf32>
    %cst_26 = arith.constant dense<0.000000e+00> : vector<128xf32>
    %65 = vector.multi_reduction <add>, %36, %cst_26 [0] : vector<8x128xf32> to vector<128xf32>
    %66 = vector.shape_cast %65 : vector<128xf32> to vector<1x128xf32>
    %67 = arith.addf %64, %66 : vector<1x128xf32>
    %c0_27 = arith.constant 0 : index
    %c0_28 = arith.constant 0 : index
    %c0_29 = arith.constant 0 : index
    %c0_30 = arith.constant 0 : index
    %68 = vector.load %arg4[%c0_27, %c0_28, %c0_29, %c0_30] : memref<1x4x1x128xf32, #tpu.memory_space<vmem>>, vector<1x1x1x128xf32>
    %69 = vector.shape_cast %68 : vector<1x1x1x128xf32> to vector<1x128xf32>
    %70 = vector.shape_cast %67 : vector<1x128xf32> to vector<1x1x1x128xf32>
    tpu.vector_store %arg4[%c0_27, %c0_28, %c0_29, %c0_30], %70 {strides = array<i32>} : memref<1x4x1x128xf32, #tpu.memory_space<vmem>>, vector<1x1x1x128xf32>,
    %c0_31 = arith.constant 0 : index
    %c1 = arith.constant 1 : index
    %c0_32 = arith.constant 0 : index
    %c0_33 = arith.constant 0 : index
    %71 = vector.load %arg4[%c0_31, %c1, %c0_32, %c0_33] : memref<1x4x1x128xf32, #tpu.memory_space<vmem>>, vector<1x1x1x128xf32>
    %72 = vector.shape_cast %71 : vector<1x1x1x128xf32> to vector<1x128xf32>
    %cst_34 = arith.constant dense<0.000000e+00> : vector<128xf32>
    %73 = vector.multi_reduction <add>, %42, %cst_34 [0] : vector<8x128xf32> to vector<128xf32>
    %74 = vector.shape_cast %73 : vector<128xf32> to vector<1x128xf32>
    %75 = arith.addf %72, %74 : vector<1x128xf32>
    %c0_35 = arith.constant 0 : index
    %c1_36 = arith.constant 1 : index
    %c0_37 = arith.constant 0 : index
    %c0_38 = arith.constant 0 : index
    %76 = vector.load %arg4[%c0_35, %c1_36, %c0_37, %c0_38] : memref<1x4x1x128xf32, #tpu.memory_space<vmem>>, vector<1x1x1x128xf32>
    %77 = vector.shape_cast %76 : vector<1x1x1x128xf32> to vector<1x128xf32>
    %78 = vector.shape_cast %75 : vector<1x128xf32> to vector<1x1x1x128xf32>
    tpu.vector_store %arg4[%c0_35, %c1_36, %c0_37, %c0_38], %78 {strides = array<i32>} : memref<1x4x1x128xf32, #tpu.memory_space<vmem>>, vector<1x1x1x128xf32>,
    %c0_39 = arith.constant 0 : index
    %c2 = arith.constant 2 : index
    %c0_40 = arith.constant 0 : index
    %c0_41 = arith.constant 0 : index
    %79 = vector.load %arg4[%c0_39, %c2, %c0_40, %c0_41] : memref<1x4x1x128xf32, #tpu.memory_space<vmem>>, vector<1x1x1x128xf32>
    %80 = vector.shape_cast %79 : vector<1x1x1x128xf32> to vector<1x128xf32>
    %cst_42 = arith.constant dense<0.000000e+00> : vector<128xf32>
    %81 = vector.multi_reduction <add>, %50, %cst_42 [0] : vector<8x128xf32> to vector<128xf32>
    %82 = vector.shape_cast %81 : vector<128xf32> to vector<1x128xf32>
    %83 = arith.addf %80, %82 : vector<1x128xf32>
    %c0_43 = arith.constant 0 : index
    %c2_44 = arith.constant 2 : index
    %c0_45 = arith.constant 0 : index
    %c0_46 = arith.constant 0 : index
    %84 = vector.load %arg4[%c0_43, %c2_44, %c0_45, %c0_46] : memref<1x4x1x128xf32, #tpu.memory_space<vmem>>, vector<1x1x1x128xf32>
    %85 = vector.shape_cast %84 : vector<1x1x1x128xf32> to vector<1x128xf32>
    %86 = vector.shape_cast %83 : vector<1x128xf32> to vector<1x1x1x128xf32>
    tpu.vector_store %arg4[%c0_43, %c2_44, %c0_45, %c0_46], %86 {strides = array<i32>} : memref<1x4x1x128xf32, #tpu.memory_space<vmem>>, vector<1x1x1x128xf32>,
    %c0_47 = arith.constant 0 : index
    %c3 = arith.constant 3 : index
    %c0_48 = arith.constant 0 : index
    %c0_49 = arith.constant 0 : index
    %87 = vector.load %arg4[%c0_47, %c3, %c0_48, %c0_49] : memref<1x4x1x128xf32, #tpu.memory_space<vmem>>, vector<1x1x1x128xf32>
    %88 = vector.shape_cast %87 : vector<1x1x1x128xf32> to vector<1x128xf32>
    %cst_50 = arith.constant dense<0.000000e+00> : vector<128xf32>
    %89 = vector.multi_reduction <add>, %62, %cst_50 [0] : vector<8x128xf32> to vector<128xf32>
    %90 = vector.shape_cast %89 : vector<128xf32> to vector<1x128xf32>
    %91 = arith.addf %88, %90 : vector<1x128xf32>
    %c0_51 = arith.constant 0 : index
    %c3_52 = arith.constant 3 : index
    %c0_53 = arith.constant 0 : index
    %c0_54 = arith.constant 0 : index
    %92 = vector.load %arg4[%c0_51, %c3_52, %c0_53, %c0_54] : memref<1x4x1x128xf32, #tpu.memory_space<vmem>>, vector<1x1x1x128xf32>
    %93 = vector.shape_cast %92 : vector<1x1x1x128xf32> to vector<1x128xf32>
    %94 = vector.shape_cast %91 : vector<1x128xf32> to vector<1x1x1x128xf32>
    tpu.vector_store %arg4[%c0_51, %c3_52, %c0_53, %c0_54], %94 {strides = array<i32>} : memref<1x4x1x128xf32, #tpu.memory_space<vmem>>, vector<1x1x1x128xf32>,
    return
  }
  func.func @transform_0(%arg0: i32, %arg1: i32) -> (i32, i32) {
    %c1_i32 = arith.constant 1 : i32
    %0 = arith.muli %arg0, %c1_i32 : i32
    %1 = arith.addi %0, %arg1 : i32
    %c0_i32 = arith.constant 0 : i32
    %2 = arith.minsi %1, %c0_i32 : i32
    %c0_i32_0 = arith.constant 0 : i32
    %c0_i32_1 = arith.constant 0 : i32
    return %2, %c0_i32_0 : i32, i32
  }
  func.func @transform_1(%arg0: i32, %arg1: i32) -> (i32, i32) {
    %c1_i32 = arith.constant 1 : i32
    %0 = arith.muli %arg0, %c1_i32 : i32
    %1 = arith.addi %0, %arg1 : i32
    %c0_i32 = arith.constant 0 : i32
    %2 = arith.minsi %1, %c0_i32 : i32
    %c0_i32_0 = arith.constant 0 : i32
    %c0_i32_1 = arith.constant 0 : i32
    return %2, %c0_i32_0 : i32, i32
  }
  func.func @transform_2(%arg0: i32, %arg1: i32) -> (i32, i32, i32, i32) {
    %c0_i32 = arith.constant 0 : i32
    %c0_i32_0 = arith.constant 0 : i32
    %c0_i32_1 = arith.constant 0 : i32
    %c0_i32_2 = arith.constant 0 : i32
    return %arg0, %c0_i32, %c0_i32_0, %c0_i32_1 : i32, i32, i32, i32
  }
}

</mosaic_0001>

<llo_original>
// kernel: tpu_custom_call.1
$region0: #{tpu_custom_call.1}
  #allocation0 [shape = 'u32[]', space=smem, size = 0x4, offset = 0x4, fixed_abs, tag = 'smem constant byte address 0x4 - core index']
  #allocation1 [shape = 'u32[144,128]{1,0:T(1,128)}', space=vmem, size = 0x12000, scoped, tag = 'internal scratch']
  %s0 = inlined_call_operand.hbm [shape: f32[8,128], index: 0, kind: input, shape index: {}]
  %s1 = inlined_call_operand.vmem [shape: u8[8,128], index: 1, kind: input, shape index: {}]
  %s2 = inlined_call_operand.hbm [shape: f32[2,4,1,128], index: 2, kind: output, shape index: {}]
  %s3 = sld [smem:[#allocation0]]
  $region49: #{tpu_custom_call.1} parent=0
    _
  %s5 = ssub.s32 1, %s3
  %s6 = scalar_select 0, %s5, %s3
  $region1: #{tpu_custom_call.1} parent=0
    #allocation2 [shape = 'u8[8192]{0}', space=vmem, size = 0x2000, scoped, tag = 'input window, operand 0']
    #allocation3 [shape = 's32[2]{0}', space=sflag, size = 0x8, scoped, tag = 'scoped memory for tpu_custom_call.1']
    #allocation4 [shape = 's32[2]{0}', space=sflag, size = 0x8, scoped, tag = 'scoped memory for tpu_custom_call.1']
    #allocation5 [shape = 'u8[4096]{0}', space=vmem, size = 0x1000, scoped, tag = 'output window, operand 0']
    %7 = vsyncpa [#allocation3], 0
    %s8 = scalar_lea.sflag [#allocation3], 1
    %9 = vsyncpa %s8, 0
    %10 = vsyncpa [#allocation4], 0
    %s11 = scalar_lea.sflag [#allocation4], 1
    %12 = vsyncpa %s11, 0
    loop: start=0, step=1, limit=4
    $region2: #{tpu_custom_call.1} parent=1 // loop_pre_header
      _
    $region3: #{tpu_custom_call.1} parent=1 // loop_header
      %s14 = sphi 0, %s18
      %p15 = scmp.ge.s32.totalorder %s14, 4
      %s21 = sphi 0, %s33
      %s22 = sphi 0, %s29
      %s23 = sphi 0, %s21
      %s24 = sphi 0, %s22
      %s25 = sphi 0, %s23
      %s26 = sphi 0, %s24
      %s42 = sphi 0, %s44
      %s45 = sphi 0, %s42
      %s46 = sphi 0, %s45
      %s62 = sphi 0, %s46
      %s74 = sphi 0, %s76
      %s77 = sphi 0, %s74
      %s78 = sphi 0, %s77
      %s94 = sphi 0, %s78
      %s100 = sphi 0, %s102
      %s103 = sphi 0, %s100
      %s104 = sphi 0, %s103
      %s120 = sphi 0, %s104
    $region4: #{tpu_custom_call.1} parent=1 // loop_header_branch
      %17 = sbr.rel (%p15) target = $region8
    $region5: #{tpu_custom_call.1} parent=1 // loop_body
      %s19 = ssub.s32 %s14, 1
      %s20 = ssub.s32 %s14, 2
      %s27 = sadd.s32 1, %s22
      %p28 = scmp.ge.s32.totalorder %s27, 1
      %s29 = scalar_select %p28, 0, %s27
      %s30 = sadd.s32 1, %s21
      %s31 = scalar_select %p28, %s30, %s21
      %p32 = scmp.ge.s32.totalorder %s31, 2
      %s33 = scalar_select %p32, 0, %s31
      %s34 = sadd.s32 %s21, %s22
      %p35 = scmp.lt.s32.totalorder %s34, 0
      %s36 = scalar_select %p35, %s34, 0
      %s37 = sadd.s32 %s33, %s29
      %p38 = scmp.lt.s32.totalorder %s37, 0
      %s39 = scalar_select %p38, %s37, 0
      %s40 = ssub.s32 %s36, %s39
      %p41 = scmp.eq.s32.totalorder %s40, 0
      %s43 = sadd.s32 %s42, 1
      %s44 = scalar_select %p41, %s42, %s43
      %p47 = pneg %p41
      %p48 = scmp.eq.s32.totalorder %s14, 1
      %p49 = por %p47, %p48
      %p50 = scmp.ne.s32.totalorder %s42, %s45
      %p51 = scmp.eq.s32.totalorder %s14, 0
      %p52 = por %p50, %p51
      %p53 = scmp.ne.s32.totalorder %s42, %s45
      %p54 = scmp.eq.s32.totalorder %s19, 1
      %p55 = por %p53, %p54
      %p56 = scmp.ne.s32.totalorder %s45, %s46
      %p57 = scmp.eq.s32.totalorder %s19, 0
      %p58 = por %p56, %p57
      %p59 = scmp.ne.s32.totalorder %s45, %s46
      %p60 = scmp.eq.s32.totalorder %s20, 1
      %p61 = por %p59, %p60
      %p63 = scmp.ne.s32.totalorder %s46, %s62
      %p64 = scmp.eq.s32.totalorder %s20, 0
      %p65 = por %p63, %p64
      %s66 = sadd.s32 %s21, %s22
      %p67 = scmp.lt.s32.totalorder %s66, 0
      %s68 = scalar_select %p67, %s66, 0
      %s69 = sadd.s32 %s33, %s29
      %p70 = scmp.lt.s32.totalorder %s69, 0
      %s71 = scalar_select %p70, %s69, 0
      %s72 = ssub.s32 %s68, %s71
      %p73 = scmp.eq.s32.totalorder %s72, 0
      %s75 = sadd.s32 %s74, 1
      %s76 = scalar_select %p73, %s74, %s75
      %p79 = pneg %p73
      %p80 = scmp.eq.s32.totalorder %s14, 1
      %p81 = por %p79, %p80
      %p82 = scmp.ne.s32.totalorder %s74, %s77
      %p83 = scmp.eq.s32.totalorder %s14, 0
      %p84 = por %p82, %p83
      %p85 = scmp.ne.s32.totalorder %s74, %s77
      %p86 = scmp.eq.s32.totalorder %s19, 1
      %p87 = por %p85, %p86
      %p88 = scmp.ne.s32.totalorder %s77, %s78
      %p89 = scmp.eq.s32.totalorder %s19, 0
      %p90 = por %p88, %p89
      %p91 = scmp.ne.s32.totalorder %s77, %s78
      %p92 = scmp.eq.s32.totalorder %s20, 1
      %p93 = por %p91, %p92
      %p95 = scmp.ne.s32.totalorder %s78, %s94
      %p96 = scmp.eq.s32.totalorder %s20, 0
      %p97 = por %p95, %p96
      %s98 = ssub.s32 %s21, %s33
      %p99 = scmp.eq.s32.totalorder %s98, 0
      %s101 = sadd.s32 %s100, 1
      %s102 = scalar_select %p99, %s100, %s101
      %p105 = pneg %p99
      %p106 = scmp.eq.s32.totalorder %s14, 1
      %p107 = por %p105, %p106
      %p108 = scmp.ne.s32.totalorder %s100, %s103
      %p109 = scmp.eq.s32.totalorder %s14, 0
      %p110 = por %p108, %p109
      %p111 = scmp.ne.s32.totalorder %s100, %s103
      %p112 = scmp.eq.s32.totalorder %s19, 1
      %p113 = por %p111, %p112
      %p114 = scmp.ne.s32.totalorder %s103, %s104
      %p115 = scmp.eq.s32.totalorder %s19, 0
      %p116 = por %p114, %p115
      %p117 = scmp.ne.s32.totalorder %s103, %s104
      %p118 = scmp.eq.s32.totalorder %s20, 1
      %p119 = por %p117, %p118
      %p121 = scmp.ne.s32.totalorder %s104, %s120
      %p122 = scmp.eq.s32.totalorder %s20, 0
      %p123 = por %p121, %p122
      %p124 = scmp.le.s32.totalorder 1, %s14
      %p125 = scmp.lt.s32.totalorder %s14, 3
      %p126 = pnand %p124, %p125
      %p127 = pneg %p126
      // Predicated region
      $region9: #{tpu_custom_call.1} parent=5 // pred_check
        _
      $region10: #{tpu_custom_call.1} parent=5 // pred_check_branch
        %129 = sbr.rel (%p126) target = $region12
      $region11: #{tpu_custom_call.1} parent=5 // pred_region
        %s130 = ssub.s32 %s14, 1
      $region12: #{tpu_custom_call.1} parent=5 // pred_fallthru
        _
      %p131 = scmp.lt.s32.totalorder %s14, 2
      // Predicated region
      $region13: #{tpu_custom_call.1} parent=5 // pred_check
        %p132 = pneg %p131
      $region14: #{tpu_custom_call.1} parent=5 // pred_check_branch
        %134 = sbr.rel (%p132) target = $region16
      $region15: #{tpu_custom_call.1} parent=5 // pred_region
        // Predicated region
        $region17: #{tpu_custom_call.1} parent=15 // pred_check
          %p135 = pneg %p52
        $region18: #{tpu_custom_call.1} parent=15 // pred_check_branch
          %137 = sbr.rel (%p135) target = $region20
        $region19: #{tpu_custom_call.1} parent=15 // pred_region
          %s138 = sand.u32 %s42, 1
          %s139 = scalar_lea.sflag [#allocation3], %s138
          %s140 = sand.u32 %s42, 1
          %s141 = smul.addr %s140, 8
          %s142 = scalar_lea.vmem [#allocation2], %s141
          %s143 = sadd.s32 %s21, %s22
          %p144 = scmp.lt.s32.totalorder %s143, 0
          %s145 = scalar_select %p144, %s143, 0
          %s147 = ssub.s32 128, 128
          %148 = vsyncadd %s139, %s147
          %s149 = smul.addr %s145, 128
          %s150 = scalar_lea.hbm %s0, %s149
          %s152 = sshll.u32 %s142, 4
          %s153 = int_to_ptr.vmem [resolvable:$true] %s152
          %155 = dma.hbm_to_vmem [thread:$0]  %s150, 128, %s153, %s139
        $region20: #{tpu_custom_call.1} parent=15 // pred_fallthru
          _
        // Predicated region
        $region21: #{tpu_custom_call.1} parent=15 // pred_check
          %p156 = pneg %p84
        $region22: #{tpu_custom_call.1} parent=15 // pred_check_branch
          %158 = sbr.rel (%p156) target = $region24
        $region23: #{tpu_custom_call.1} parent=15 // pred_region
          %s159 = sadd.s32 %s21, %s22
          %p160 = scmp.lt.s32.totalorder %s159, 0
          %s161 = scalar_select %p160, %s159, 0
          %p162 = scmp.lt.s32.totalorder %s161, 0
          %s163 = scalar_select %p162, %s161, 0
          %s164 = smul.addr %s163, 2
          %s165 = scalar_lea.vmem %s1, %s164
          %s166 = sadd.s32 %s21, %s22
          %p167 = scmp.lt.s32.totalorder %s166, 0
          %s168 = scalar_select %p167, %s166, 0
        $region24: #{tpu_custom_call.1} parent=15 // pred_fallthru
          _
      $region16: #{tpu_custom_call.1} parent=5 // pred_fallthru
        _
      %p169 = scmp.le.s32.totalorder 1, %s14
      %p170 = scmp.lt.s32.totalorder %s14, 3
      %p171 = pnand %p169, %p170
      %p172 = pneg %p171
      // Predicated region
      $region25: #{tpu_custom_call.1} parent=5 // pred_check
        _
      $region26: #{tpu_custom_call.1} parent=5 // pred_check_branch
        %174 = sbr.rel (%p171) target = $region28
      $region27: #{tpu_custom_call.1} parent=5 // pred_region
        %s175 = ssub.s32 %s14, 1
        %s176 = sand.u32 %s45, 1
        %s177 = scalar_lea.sflag [#allocation3], %s176
        %s178 = sand.u32 %s45, 1
        %s179 = smul.addr %s178, 8
        %s180 = scalar_lea.vmem [#allocation2], %s179
        // Predicated region
        $region29: #{tpu_custom_call.1} parent=27 // pred_check
          %p181 = pneg %p58
        $region30: #{tpu_custom_call.1} parent=27 // pred_check_branch
          %183 = sbr.rel (%p181) target = $region32
        $region31: #{tpu_custom_call.1} parent=27 // pred_region
          %184 = dma.done %s177, 128
        $region32: #{tpu_custom_call.1} parent=27 // pred_fallthru
          _
        %s185 = sand.u32 %s45, 1
        %s186 = scalar_lea.sflag [#allocation3], %s185
        %s187 = sand.u32 %s45, 1
        %s188 = smul.addr %s187, 8
        %s189 = scalar_lea.vmem [#allocation2], %s188
        %p190 = pneg %p58
        %p191 = pneg %p55
        %s192 = sadd.s32 %s23, %s24
        %p193 = scmp.lt.s32.totalorder %s192, 0
        %s194 = scalar_select %p193, %s192, 0
        %p195 = scmp.lt.s32.totalorder %s194, 0
        %s196 = scalar_select %p195, %s194, 0
        %s197 = smul.addr %s196, 2
        %s198 = scalar_lea.vmem %s1, %s197
        %p199 = pneg %p90
        %p200 = pneg %p87
        %p201 = pneg %p116
        %p202 = pneg %p113
        %s203 = sand.u32 %s103, 1
        %s204 = scalar_lea.sflag [#allocation4], %s203
        %s205 = sand.u32 %s103, 1
        %s206 = smul.addr %s205, 4
        %s207 = scalar_lea.vmem [#allocation5], %s206
        %s208 = sadd.s32 %s23, %s24
        %p209 = scmp.lt.s32.totalorder %s208, 0
        %s210 = scalar_select %p209, %s208, 0
        %s211 = sadd.s32 %s23, %s24
        %p212 = scmp.lt.s32.totalorder %s211, 0
        %s213 = scalar_select %p212, %s211, 0
        %p214 = scmp.lt.s32.totalorder %s213, 0
        %s215 = scalar_select %p214, %s213, 0
        %s216 = smul.addr %s215, 2
        %s217 = scalar_lea.vmem %s1, %s216
        %s218 = sadd.s32 %s23, %s24
        %p219 = scmp.lt.s32.totalorder %s218, 0
        %s220 = scalar_select %p219, %s218, 0
        %p221 = scmp.eq.s32.totalorder %s24, 0
        // Predicated region
        $region33: #{tpu_custom_call.1} parent=27 // pred_check
          %p222 = pneg %p221
        $region34: #{tpu_custom_call.1} parent=27 // pred_check_branch
          %224 = sbr.rel (%p222) target = $region36
        $region35: #{tpu_custom_call.1} parent=27 // pred_region
          %225 = vst [vmem:[%s207] sm:$0x1] 0.0
          %226 = vst [vmem:[%s207 + $0x1] sm:$0x1] 0.0
          %227 = vst [vmem:[%s207 + $0x2] sm:$0x1] 0.0
          %228 = vst [vmem:[%s207 + $0x3] sm:$0x1] 0.0
        $region36: #{tpu_custom_call.1} parent=27 // pred_fallthru
          _
        %s229 = sadd.s32 %s23, %s24
        %s230 = smul.u32 %s229, 1024
        %v231 = vlaneseq
        %v232 = vshrl.u32 %v231, 7
        %v233 = vlaneseq
        %v234 = vand.u32 %v233, 127
        %v235 = vmul.u32 %v232, 128
        %v236 = vstv %s230
        %v237 = vadd.s32 %v236, %v235
        %v238 = vadd.s32 %v237, %v234
        %vm239 = vcmp.lt.s32.totalorder %v238, 512
        %v240 = vld [vmem:[%s180] sm:$0xff]
        %v241 = vld [vmem:[%s217] sm:$0x3]
        %v242 = vunpack.c.0.s8 %v241
        %v243 = vand.u32 %v242, 255
        %v244 = vcvt.s32.f32 %v243
        %vm245 = vcmp.eq.f32.partialorder %v244, 1.0
        %vm246 = vcmp.eq.f32.partialorder %v244, 0.0
        %v247 = vsel %vm246, 1.0, %v244
        %v248 = vsel %vm245, -1.0, %v247
        %vm249 = vcmp.ne.f32.partialorder %v248, 255.0
        %v250 = vsel %vm249, 1, 0
        %v251 = vcvt.s32.f32 %v250
        %v252 = vmul.f32 %v240, %v251
        %vm253 = vcmp.eq.f32.partialorder %v248, 1.0
        %vm254 = vmand %vm239, %vm253
        %v255 = vsel %vm254, 1.0, 0.0
        %vm256 = vcmp.eq.f32.partialorder %v248, -1.0
        %vm257 = vmand %vm239, %vm256
        %v258 = vsel %vm257, 1.0, 0.0
        %v259 = vadd.f32 %v248, 1.0
        %v260 = vmul.f32 %v259, 0.5
        %v261 = vmul.f32 %v252, %v252
        %v262 = vmul.f32 %v260, %v261
        %v263 = vsel %vm239, %v262, 0.0
        %v264 = vsub.f32 2.0, %v252
        %v265 = vmax.f32 %v264, 0.0
        %v266 = vsub.f32 1.0, %v248
        %v267 = vmul.f32 %v266, 0.5
        %v268 = vmul.f32 %v265, %v265
        %v269 = vmul.f32 %v267, %v268
        %v270 = vsel %vm239, %v269, 0.0
        %v271 = vld [vmem:[%s207] sm:$0x1]
        %v272 = vrot.slane %v255, 4
        %v273 = vadd.f32 %v255, %v272
        %v274 = vrot.slane %v273, 2
        %v275 = vadd.f32 %v273, %v274
        %v276 = vrot.slane %v275, 1
        %v277 = vadd.f32 %v275, %v276
        %v278 = vadd.f32 %v271, %v277
        %279 = vst [vmem:[%s207] sm:$0x1] %v278
        %s280 = scalar_lea.vmem %s207, 1 [#allocation5]
        %v281 = vld [vmem:[%s280] sm:$0x1]
        %v282 = vrot.slane %v258, 4
        %v283 = vadd.f32 %v258, %v282
        %v284 = vrot.slane %v283, 2
        %v285 = vadd.f32 %v283, %v284
        %v286 = vrot.slane %v285, 1
        %v287 = vadd.f32 %v285, %v286
        %v288 = vadd.f32 %v281, %v287
        %289 = vst [vmem:[%s280] sm:$0x1] %v288
        %s290 = scalar_lea.vmem %s207, 2 [#allocation5]
        %v291 = vld [vmem:[%s290] sm:$0x1]
        %v292 = vrot.slane %v263, 4
        %v293 = vadd.f32 %v263, %v292
        %v294 = vrot.slane %v293, 2
        %v295 = vadd.f32 %v293, %v294
        %v296 = vrot.slane %v295, 1
        %v297 = vadd.f32 %v295, %v296
        %v298 = vadd.f32 %v291, %v297
        %299 = vst [vmem:[%s290] sm:$0x1] %v298
        %s300 = scalar_lea.vmem %s207, 3 [#allocation5]
        %v301 = vld [vmem:[%s300] sm:$0x1]
        %v302 = vrot.slane %v270, 4
        %v303 = vadd.f32 %v270, %v302
        %v304 = vrot.slane %v303, 2
        %v305 = vadd.f32 %v303, %v304
        %v306 = vrot.slane %v305, 1
        %v307 = vadd.f32 %v305, %v306
        %v308 = vadd.f32 %v301, %v307
        %309 = vst [vmem:[%s300] sm:$0x1] %v308
        %s310 = sand.u32 %s103, 1
        %s311 = scalar_lea.sflag [#allocation4], %s310
        %s312 = sand.u32 %s103, 1
        %s313 = smul.addr %s312, 4
        %s314 = scalar_lea.vmem [#allocation5], %s313
        // Predicated region
        $region37: #{tpu_custom_call.1} parent=27 // pred_check
          %p315 = pneg %p113
        $region38: #{tpu_custom_call.1} parent=27 // pred_check_branch
          %317 = sbr.rel (%p315) target = $region40
        $region39: #{tpu_custom_call.1} parent=27 // pred_region
          %s319 = ssub.s32 64, 64
          %320 = vsyncadd %s311, %s319
          %s321 = smul.addr %s23, 4
          %s322 = smul.addr %s321, 16
          %s323 = scalar_lea.hbm %s2, %s322
          %s324 = sshll.u32 %s314, 4
          %s325 = int_to_ptr.vmem [resolvable:$true] %s324
          %330 = dma.vmem_to_hbm [thread:$0]  %s325, 64, %s323, %s311, 16, 16, 1
        $region40: #{tpu_custom_call.1} parent=27 // pred_fallthru
          _
      $region28: #{tpu_custom_call.1} parent=5 // pred_fallthru
        _
      %p331 = scmp.le.s32.totalorder 2, %s14
      // Predicated region
      $region41: #{tpu_custom_call.1} parent=5 // pred_check
        %p332 = pneg %p331
      $region42: #{tpu_custom_call.1} parent=5 // pred_check_branch
        %334 = sbr.rel (%p332) target = $region44
      $region43: #{tpu_custom_call.1} parent=5 // pred_region
        %s335 = ssub.s32 %s14, 2
        // Predicated region
        $region45: #{tpu_custom_call.1} parent=43 // pred_check
          %p336 = pneg %p119
        $region46: #{tpu_custom_call.1} parent=43 // pred_check_branch
          %338 = sbr.rel (%p336) target = $region48
        $region47: #{tpu_custom_call.1} parent=43 // pred_region
          %s339 = sand.u32 %s104, 1
          %s340 = scalar_lea.sflag [#allocation4], %s339
          %s341 = sand.u32 %s104, 1
          %s342 = smul.addr %s341, 4
          %s343 = scalar_lea.vmem [#allocation5], %s342
          %344 = dma.done %s340, 64
        $region48: #{tpu_custom_call.1} parent=43 // pred_fallthru
          _
      $region44: #{tpu_custom_call.1} parent=5 // pred_fallthru
        _
    $region6: #{tpu_custom_call.1} parent=1 // loop_footer
      %s18 = sadd.s32 1, %s14
    $region7: #{tpu_custom_call.1} parent=1 // loop_footer_branch
      %13 = sbr.rel target = $region3
    $region8: #{tpu_custom_call.1} parent=1 // loop_exit
      _
    %345 = vsyncpa [#allocation3], 1
    %s346 = scalar_lea.sflag [#allocation3], 1
    %347 = vsyncpa %s346, 1
    %348 = vsyncpa [#allocation4], 1
    %s349 = scalar_lea.sflag [#allocation4], 1
    %350 = vsyncpa %s349, 1

</llo_original>
